<compile_context>
chip_gen: v7x
topology: tpu7x:2x2x1
jax: 0.10.0
libtpu: 0.0.40
codegen_flags: <defaults>
</compile_context>

<pallas_src>
import functools

import jax
import jax.numpy as jnp
import numpy as np
from jax.experimental import pallas as pl
from jax.experimental.pallas import tpu as pltpu  # noqa: F401  (TPU backend)

_KERNEL_SIZES = (6, 5, 5, 3)
_STRIDES = (3, 3, 2, 1)
_EPS = 1e-5  # PyTorch GroupNorm default


# --------------------------------------------------------------------------
# Fused kernel: 4 x (conv-as-matmul + bias + GroupNorm(1) + SiLU), one step
# --------------------------------------------------------------------------

def _embedding_kernel(x_ref, w0_ref, w1_ref, w2_ref, w3_ref, pp_ref, o_ref,
                      *, widths, eps):
    # x_ref  : (B*n_pts, seq_len*2)  bf16   flattened channels-last input rows
    # wX_ref : (L_in*C_in, L_out*C_out) bf16  conv folded into a dense matmul
    # pp_ref : (12, pad_cols) f32    rows [3i, 3i+1, 3i+2] = bias/gamma/beta of
    #                                layer i, tiled over positions, zero-padded
    # o_ref  : (B*n_pts, latent_dim) f32
    w_refs = (w0_ref, w1_ref, w2_ref, w3_ref)

    h = x_ref[...]                                       # bf16 MXU operand
    act = None
    for i, (w_ref, width) in enumerate(zip(w_refs, widths)):
        # Conv1d as a single MXU matmul (bf16 operands, f32 accumulation).
        y = jnp.dot(h, w_ref[...], preferred_element_type=jnp.float32)
        y = y + pp_ref[3 * i:3 * i + 1, :width]          # conv bias

        # GroupNorm(num_groups=1): per-sample stats over all positions and
        # channels == last-axis (lane) reduction of the flat slab.  f32 chain.
        mean = jnp.mean(y, axis=-1, keepdims=True)
        var = jnp.mean(jnp.square(y - mean), axis=-1, keepdims=True)
        y = (y - mean) * jax.lax.rsqrt(var + eps)
        y = (y * pp_ref[3 * i + 1:3 * i + 2, :width]
             + pp_ref[3 * i + 2:3 * i + 3, :width])

        # SiLU
        y = y * jax.nn.sigmoid(y)

        act = y                                          # keep f32 for output
        h = y.astype(jnp.bfloat16)                       # bf16 for next matmul

    o_ref[...] = act.astype(o_ref.dtype)                 # final L_out == 1


# --------------------------------------------------------------------------
# Parameter preparation (one-time, host-side, outside the hot path)
# --------------------------------------------------------------------------

def _fold_conv_weight(w, L_in, stride):
    """PyTorch Conv1d weight (C_out, C_in, K) -> dense matmul weight
    (L_in*C_in, L_out*C_out) applying the whole VALID strided conv to a flat
    per-sample row laid out position-major / channel-minor."""
    w = np.asarray(w, np.float32)
    C_out, C_in, K = w.shape
    L_out = (L_in - K) // stride + 1
    Wb = np.zeros((L_in * C_in, L_out * C_out), np.float32)
    wk = np.transpose(w, (2, 1, 0)).reshape(K * C_in, C_out)   # [(k,ci), co]
    for l in range(L_out):
        r0 = l * stride * C_in
        Wb[r0:r0 + K * C_in, l * C_out:(l + 1) * C_out] = wk
    return Wb


def prepare_embedding_params(params, seq_len):
    """Fold conv weights into bf16 matmul matrices and pack all 12 per-channel
    vectors (bias/gamma/beta x 4 layers) into one zero-padded (12, P) f32 array
    so the kernel takes 6 operands instead of 17."""
    # Layer geometry.
    L = seq_len
    geoms = []
    for (w, _, _, _), k, s in zip(params, _KERNEL_SIZES, _STRIDES):
        C_out = w.shape[0]
        L_out = (L - k) // s + 1
        geoms.append((L, L_out, C_out))
        L = L_out
    assert L == 1, "conv stack must reduce seq_len to length 1"

    widths = [lo * co for (_, lo, co) in geoms]
    pad_cols = ((max(widths) + 127) // 128) * 128        # lane-aligned packing

    weights, rows = [], []
    for (w, b, g, t), s, (L_in, L_out, C_out) in zip(params, _STRIDES, geoms):
        weights.append(jnp.asarray(_fold_conv_weight(w, L_in, s), jnp.bfloat16))
        width = L_out * C_out
        for vec in (b, g, t):
            flat = np.tile(np.asarray(vec, np.float32), L_out)    # (width,)
            rows.append(np.pad(flat, (0, pad_cols - width)))
    packed = jnp.asarray(np.stack(rows), jnp.float32)             # (12, pad)
    return weights, packed


# --------------------------------------------------------------------------
# Forward pass
# --------------------------------------------------------------------------

def embedding_forward(x, folded, *, seq_len, n_pts, latent_dim, eps=_EPS):
    """x: (B, seq_len, n_pts, 2) -> (B, n_pts, latent_dim)."""
    weights, packed = folded
    widths = tuple(int(w.shape[1]) for w in weights)      # static (from shapes)
    B = x.shape[0]
    M = B * n_pts

    # == x.permute(0,2,3,1).view(-1,2,seq_len) in PyTorch, flattened per sample
    #    position-major / channel-minor, cast once to bf16 (fused into the
    #    transpose; halves the kernel's input DMA bytes).
    h0 = (jnp.transpose(x, (0, 2, 1, 3))
             .reshape(M, seq_len * 2)
             .astype(jnp.bfloat16))

    out = pl.pallas_call(
        functools.partial(_embedding_kernel, widths=widths, eps=eps),
        out_shape=jax.ShapeDtypeStruct((M, latent_dim), jnp.float32),
        # No grid: a single step over all B*n_pts rows; every operand is a
        # whole-array VMEM block (total footprint << 1 MiB on any generation).
    )(h0, *weights, packed)

    return out.reshape(B, n_pts, latent_dim)


# --------------------------------------------------------------------------
# Parameter init (matches Conv1d / GroupNorm-style params)
# --------------------------------------------------------------------------

def init_embedding_params(key, latent_dim):
    dims = (2, latent_dim // 8, latent_dim // 4, latent_dim // 2, latent_dim)
    params = []
    for cin, cout, k in zip(dims[:-1], dims[1:], _KERNEL_SIZES):
        key, k1, k2, k3, k4 = jax.random.split(key, 5)
        bound = 1.0 / np.sqrt(cin * k)
        w = jax.random.uniform(k1, (cout, cin, k), jnp.float32, -bound, bound)
        b = jax.random.uniform(k2, (cout,), jnp.float32, -bound, bound)
        gamma = 1.0 + 0.1 * jax.random.normal(k3, (cout,), jnp.float32)
        beta = 0.1 * jax.random.normal(k4, (cout,), jnp.float32)
        params.append((w, b, gamma, beta))
    return params


# --------------------------------------------------------------------------
# Pure-JAX reference (lax.conv) for correctness checks
# --------------------------------------------------------------------------

def reference_forward(x, params, *, seq_len, n_pts, latent_dim, eps=_EPS,
                      matmul_in_bf16=False):
    B = x.shape[0]
    h = jnp.transpose(x, (0, 2, 3, 1)).reshape(B * n_pts, 2, seq_len)   # NCL
    for (w, b, g, t), s in zip(params, _STRIDES):
        lhs, rhs = h, w
        if matmul_in_bf16:   # mimic the kernel's single-pass bf16 MXU numerics
            lhs = lhs.astype(jnp.bfloat16)
            rhs = rhs.astype(jnp.bfloat16)
        h = jax.lax.conv_general_dilated(
            lhs, rhs, window_strides=(s,), padding="VALID",
            dimension_numbers=("NCH", "OIH", "NCH"),
            preferred_element_type=jnp.float32,
            precision=jax.lax.Precision.HIGHEST)
        h = h + b[None, :, None]
        mean = jnp.mean(h, axis=(1, 2), keepdims=True)
        var = jnp.mean(jnp.square(h - mean), axis=(1, 2), keepdims=True)
        h = (h - mean) / jnp.sqrt(var + eps)
        h = h * g[None, :, None] + t[None, :, None]
        h = h * jax.nn.sigmoid(h)
    return h.reshape(B, n_pts, latent_dim)


if __name__ == "__main__":
    # seq_len=90 reduces through (k=6,s=3)->(k=5,s=3)->(k=5,s=2)->(k=3,s=1):
    # 90 -> 29 -> 9 -> 3 -> 1, as the module requires.
    B, n_pts, seq_len, latent_dim = 2, 8, 90, 32

    key = jax.random.PRNGKey(0)
    kx, kp = jax.random.split(key)
    x = jax.random.normal(kx, (B, seq_len, n_pts, 2), jnp.float32)
    params = init_embedding_params(kp, latent_dim)
    folded = prepare_embedding_params(params, seq_len)

    fwd = jax.jit(functools.partial(embedding_forward, seq_len=seq_len,
                                    n_pts=n_pts, latent_dim=latent_dim))
    out = jax.block_until_ready(fwd(x, folded))
    assert out.shape == (B, n_pts, latent_dim)

    # Strict structural check: reference using the same single-pass bf16 MXU
    # numerics as the kernel -> differences are only f32 reassociation noise.
    ref_bf16 = reference_forward(x, params, seq_len=seq_len, n_pts=n_pts,
                                 latent_dim=latent_dim, matmul_in_bf16=True)
    np.testing.assert_allclose(np.asarray(out), np.asarray(ref_bf16),
                               rtol=1e-2, atol=1e-2)

    # Loose sanity bound vs the full-f32 (HIGHEST) reference: quantifies only
    # the deliberate bf16-matmul precision choice, not kernel structure.
    ref_f32 = reference_forward(x, params, seq_len=seq_len, n_pts=n_pts,
                                latent_dim=latent_dim, matmul_in_bf16=False)
    np.testing.assert_allclose(np.asarray(out), np.asarray(ref_f32),
                               rtol=1e-1, atol=1e-1)

    print("KERNEL_OK")
</pallas_src>

<mosaic_0001>
module attributes {stable_mosaic.version = 11 : i64} {
  func.func @_embedding_kernel(%arg0: memref<16x180xbf16, #tpu.memory_space<vmem>>, %arg1: memref<180x116xbf16, #tpu.memory_space<vmem>>, %arg2: memref<116x72xbf16, #tpu.memory_space<vmem>>, %arg3: memref<72x48xbf16, #tpu.memory_space<vmem>>, %arg4: memref<48x32xbf16, #tpu.memory_space<vmem>>, %arg5: memref<12x128xf32, #tpu.memory_space<vmem>>, %arg6: memref<16x32xf32, #tpu.memory_space<vmem>>) attributes {dimension_semantics = [], scalar_prefetch = 0 : i64, scratch_operands = 0 : i64, tpu.core_type = #tpu.core_type<tc>} {
    %c0 = arith.constant 0 : index
    %c0_0 = arith.constant 0 : index
    %0 = vector.load %arg0[%c0, %c0_0] : memref<16x180xbf16, #tpu.memory_space<vmem>>, vector<16x180xbf16>
    %c0_1 = arith.constant 0 : index
    %c0_2 = arith.constant 0 : index
    %1 = vector.load %arg1[%c0_1, %c0_2] : memref<180x116xbf16, #tpu.memory_space<vmem>>, vector<180x116xbf16>
    %cst = arith.constant dense<0.000000e+00> : vector<16x116xf32>
    %2 = tpu.matmul %0, %1, %cst {dimension_numbers = #tpu.dot_dimension_numbers<[1], [0], [0], [1], [0, 0, 1, 1], [], []>} : vector<16x180xbf16>, vector<180x116xbf16>, vector<16x116xf32> -> vector<16x116xf32>
    %c0_3 = arith.constant 0 : index
    %c0_4 = arith.constant 0 : index
    %3 = vector.load %arg5[%c0_3, %c0_4] : memref<12x128xf32, #tpu.memory_space<vmem>>, vector<1x116xf32>
    %4 = vector.broadcast %3 : vector<1x116xf32> to vector<16x116xf32>
    %5 = arith.addf %2, %4 : vector<16x116xf32>
    %cst_5 = arith.constant dense<0.000000e+00> : vector<16xf32>
    %6 = vector.multi_reduction <add>, %5, %cst_5 [1] : vector<16x116xf32> to vector<16xf32>
    %7 = vector.shape_cast %6 : vector<16xf32> to vector<16x1xf32>
    %cst_6 = arith.constant 1.160000e+02 : f32
    %8 = vector.broadcast %cst_6 : f32 to vector<16x1xf32>
    %9 = arith.divf %7, %8 : vector<16x1xf32>
    %10 = vector.broadcast %9 : vector<16x1xf32> to vector<16x116xf32>
    %11 = arith.subf %5, %10 : vector<16x116xf32>
    %12 = arith.mulf %11, %11 : vector<16x116xf32>
    %cst_7 = arith.constant dense<0.000000e+00> : vector<16xf32>
    %13 = vector.multi_reduction <add>, %12, %cst_7 [1] : vector<16x116xf32> to vector<16xf32>
    %14 = vector.shape_cast %13 : vector<16xf32> to vector<16x1xf32>
    %cst_8 = arith.constant 1.160000e+02 : f32
    %15 = vector.broadcast %cst_8 : f32 to vector<16x1xf32>
    %16 = arith.divf %14, %15 : vector<16x1xf32>
    %17 = vector.broadcast %9 : vector<16x1xf32> to vector<16x116xf32>
    %18 = arith.subf %5, %17 : vector<16x116xf32>
    %cst_9 = arith.constant 9.99999974E-6 : f32
    %19 = vector.broadcast %cst_9 : f32 to vector<16x1xf32>
    %20 = arith.addf %16, %19 : vector<16x1xf32>
    %21 = math.rsqrt %20 : vector<16x1xf32>
    %22 = vector.broadcast %21 : vector<16x1xf32> to vector<16x116xf32>
    %23 = arith.mulf %18, %22 : vector<16x116xf32>
    %c1 = arith.constant 1 : index
    %c0_10 = arith.constant 0 : index
    %24 = vector.load %arg5[%c1, %c0_10] : memref<12x128xf32, #tpu.memory_space<vmem>>, vector<1x116xf32>
    %25 = vector.broadcast %24 : vector<1x116xf32> to vector<16x116xf32>
    %26 = arith.mulf %23, %25 : vector<16x116xf32>
    %c2 = arith.constant 2 : index
    %c0_11 = arith.constant 0 : index
    %27 = vector.load %arg5[%c2, %c0_11] : memref<12x128xf32, #tpu.memory_space<vmem>>, vector<1x116xf32>
    %28 = vector.broadcast %27 : vector<1x116xf32> to vector<16x116xf32>
    %29 = arith.addf %26, %28 : vector<16x116xf32>
    %30 = arith.negf %29 : vector<16x116xf32>
    %31 = math.exp %30 : vector<16x116xf32>
    %cst_12 = arith.constant 1.000000e+00 : f32
    %32 = vector.broadcast %cst_12 : f32 to vector<16x116xf32>
    %33 = arith.addf %32, %31 : vector<16x116xf32>
    %34 = arith.divf %32, %33 : vector<16x116xf32>
    %35 = arith.mulf %29, %34 : vector<16x116xf32>
    %36 = arith.truncf %35 : vector<16x116xf32> to vector<16x116xbf16>
    %c0_13 = arith.constant 0 : index
    %c0_14 = arith.constant 0 : index
    %37 = vector.load %arg2[%c0_13, %c0_14] : memref<116x72xbf16, #tpu.memory_space<vmem>>, vector<116x72xbf16>
    %cst_15 = arith.constant dense<0.000000e+00> : vector<16x72xf32>
    %38 = tpu.matmul %36, %37, %cst_15 {dimension_numbers = #tpu.dot_dimension_numbers<[1], [0], [0], [1], [0, 0, 1, 1], [], []>} : vector<16x116xbf16>, vector<116x72xbf16>, vector<16x72xf32> -> vector<16x72xf32>
    %c3 = arith.constant 3 : index
    %c0_16 = arith.constant 0 : index
    %39 = vector.load %arg5[%c3, %c0_16] : memref<12x128xf32, #tpu.memory_space<vmem>>, vector<1x72xf32>
    %40 = vector.broadcast %39 : vector<1x72xf32> to vector<16x72xf32>
    %41 = arith.addf %38, %40 : vector<16x72xf32>
    %cst_17 = arith.constant dense<0.000000e+00> : vector<16xf32>
    %42 = vector.multi_reduction <add>, %41, %cst_17 [1] : vector<16x72xf32> to vector<16xf32>
    %43 = vector.shape_cast %42 : vector<16xf32> to vector<16x1xf32>
    %cst_18 = arith.constant 7.200000e+01 : f32
    %44 = vector.broadcast %cst_18 : f32 to vector<16x1xf32>
    %45 = arith.divf %43, %44 : vector<16x1xf32>
    %46 = vector.broadcast %45 : vector<16x1xf32> to vector<16x72xf32>
    %47 = arith.subf %41, %46 : vector<16x72xf32>
    %48 = arith.mulf %47, %47 : vector<16x72xf32>
    %cst_19 = arith.constant dense<0.000000e+00> : vector<16xf32>
    %49 = vector.multi_reduction <add>, %48, %cst_19 [1] : vector<16x72xf32> to vector<16xf32>
    %50 = vector.shape_cast %49 : vector<16xf32> to vector<16x1xf32>
    %cst_20 = arith.constant 7.200000e+01 : f32
    %51 = vector.broadcast %cst_20 : f32 to vector<16x1xf32>
    %52 = arith.divf %50, %51 : vector<16x1xf32>
    %53 = vector.broadcast %45 : vector<16x1xf32> to vector<16x72xf32>
    %54 = arith.subf %41, %53 : vector<16x72xf32>
    %cst_21 = arith.constant 9.99999974E-6 : f32
    %55 = vector.broadcast %cst_21 : f32 to vector<16x1xf32>
    %56 = arith.addf %52, %55 : vector<16x1xf32>
    %57 = math.rsqrt %56 : vector<16x1xf32>
    %58 = vector.broadcast %57 : vector<16x1xf32> to vector<16x72xf32>
    %59 = arith.mulf %54, %58 : vector<16x72xf32>
    %c4 = arith.constant 4 : index
    %c0_22 = arith.constant 0 : index
    %60 = vector.load %arg5[%c4, %c0_22] : memref<12x128xf32, #tpu.memory_space<vmem>>, vector<1x72xf32>
    %61 = vector.broadcast %60 : vector<1x72xf32> to vector<16x72xf32>
    %62 = arith.mulf %59, %61 : vector<16x72xf32>
    %c5 = arith.constant 5 : index
    %c0_23 = arith.constant 0 : index
    %63 = vector.load %arg5[%c5, %c0_23] : memref<12x128xf32, #tpu.memory_space<vmem>>, vector<1x72xf32>
    %64 = vector.broadcast %63 : vector<1x72xf32> to vector<16x72xf32>
    %65 = arith.addf %62, %64 : vector<16x72xf32>
    %66 = arith.negf %65 : vector<16x72xf32>
    %67 = math.exp %66 : vector<16x72xf32>
    %cst_24 = arith.constant 1.000000e+00 : f32
    %68 = vector.broadcast %cst_24 : f32 to vector<16x72xf32>
    %69 = arith.addf %68, %67 : vector<16x72xf32>
    %70 = arith.divf %68, %69 : vector<16x72xf32>
    %71 = arith.mulf %65, %70 : vector<16x72xf32>
    %72 = arith.truncf %71 : vector<16x72xf32> to vector<16x72xbf16>
    %c0_25 = arith.constant 0 : index
    %c0_26 = arith.constant 0 : index
    %73 = vector.load %arg3[%c0_25, %c0_26] : memref<72x48xbf16, #tpu.memory_space<vmem>>, vector<72x48xbf16>
    %cst_27 = arith.constant dense<0.000000e+00> : vector<16x48xf32>
    %74 = tpu.matmul %72, %73, %cst_27 {dimension_numbers = #tpu.dot_dimension_numbers<[1], [0], [0], [1], [0, 0, 1, 1], [], []>} : vector<16x72xbf16>, vector<72x48xbf16>, vector<16x48xf32> -> vector<16x48xf32>
    %c6 = arith.constant 6 : index
    %c0_28 = arith.constant 0 : index
    %75 = vector.load %arg5[%c6, %c0_28] : memref<12x128xf32, #tpu.memory_space<vmem>>, vector<1x48xf32>
    %76 = vector.broadcast %75 : vector<1x48xf32> to vector<16x48xf32>
    %77 = arith.addf %74, %76 : vector<16x48xf32>
    %cst_29 = arith.constant dense<0.000000e+00> : vector<16xf32>
    %78 = vector.multi_reduction <add>, %77, %cst_29 [1] : vector<16x48xf32> to vector<16xf32>
    %79 = vector.shape_cast %78 : vector<16xf32> to vector<16x1xf32>
    %cst_30 = arith.constant 4.800000e+01 : f32
    %80 = vector.broadcast %cst_30 : f32 to vector<16x1xf32>
    %81 = arith.divf %79, %80 : vector<16x1xf32>
    %82 = vector.broadcast %81 : vector<16x1xf32> to vector<16x48xf32>
    %83 = arith.subf %77, %82 : vector<16x48xf32>
    %84 = arith.mulf %83, %83 : vector<16x48xf32>
    %cst_31 = arith.constant dense<0.000000e+00> : vector<16xf32>
    %85 = vector.multi_reduction <add>, %84, %cst_31 [1] : vector<16x48xf32> to vector<16xf32>
    %86 = vector.shape_cast %85 : vector<16xf32> to vector<16x1xf32>
    %cst_32 = arith.constant 4.800000e+01 : f32
    %87 = vector.broadcast %cst_32 : f32 to vector<16x1xf32>
    %88 = arith.divf %86, %87 : vector<16x1xf32>
    %89 = vector.broadcast %81 : vector<16x1xf32> to vector<16x48xf32>
    %90 = arith.subf %77, %89 : vector<16x48xf32>
    %cst_33 = arith.constant 9.99999974E-6 : f32
    %91 = vector.broadcast %cst_33 : f32 to vector<16x1xf32>
    %92 = arith.addf %88, %91 : vector<16x1xf32>
    %93 = math.rsqrt %92 : vector<16x1xf32>
    %94 = vector.broadcast %93 : vector<16x1xf32> to vector<16x48xf32>
    %95 = arith.mulf %90, %94 : vector<16x48xf32>
    %c7 = arith.constant 7 : index
    %c0_34 = arith.constant 0 : index
    %96 = vector.load %arg5[%c7, %c0_34] : memref<12x128xf32, #tpu.memory_space<vmem>>, vector<1x48xf32>
    %97 = vector.broadcast %96 : vector<1x48xf32> to vector<16x48xf32>
    %98 = arith.mulf %95, %97 : vector<16x48xf32>
    %c8 = arith.constant 8 : index
    %c0_35 = arith.constant 0 : index
    %99 = vector.load %arg5[%c8, %c0_35] : memref<12x128xf32, #tpu.memory_space<vmem>>, vector<1x48xf32>
    %100 = vector.broadcast %99 : vector<1x48xf32> to vector<16x48xf32>
    %101 = arith.addf %98, %100 : vector<16x48xf32>
    %102 = arith.negf %101 : vector<16x48xf32>
    %103 = math.exp %102 : vector<16x48xf32>
    %cst_36 = arith.constant 1.000000e+00 : f32
    %104 = vector.broadcast %cst_36 : f32 to vector<16x48xf32>
    %105 = arith.addf %104, %103 : vector<16x48xf32>
    %106 = arith.divf %104, %105 : vector<16x48xf32>
    %107 = arith.mulf %101, %106 : vector<16x48xf32>
    %108 = arith.truncf %107 : vector<16x48xf32> to vector<16x48xbf16>
    %c0_37 = arith.constant 0 : index
    %c0_38 = arith.constant 0 : index
    %109 = vector.load %arg4[%c0_37, %c0_38] : memref<48x32xbf16, #tpu.memory_space<vmem>>, vector<48x32xbf16>
    %cst_39 = arith.constant dense<0.000000e+00> : vector<16x32xf32>
    %110 = tpu.matmul %108, %109, %cst_39 {dimension_numbers = #tpu.dot_dimension_numbers<[1], [0], [0], [1], [0, 0, 1, 1], [], []>} : vector<16x48xbf16>, vector<48x32xbf16>, vector<16x32xf32> -> vector<16x32xf32>
    %c9 = arith.constant 9 : index
    %c0_40 = arith.constant 0 : index
    %111 = vector.load %arg5[%c9, %c0_40] : memref<12x128xf32, #tpu.memory_space<vmem>>, vector<1x32xf32>
    %112 = vector.broadcast %111 : vector<1x32xf32> to vector<16x32xf32>
    %113 = arith.addf %110, %112 : vector<16x32xf32>
    %cst_41 = arith.constant dense<0.000000e+00> : vector<16xf32>
    %114 = vector.multi_reduction <add>, %113, %cst_41 [1] : vector<16x32xf32> to vector<16xf32>
    %115 = vector.shape_cast %114 : vector<16xf32> to vector<16x1xf32>
    %cst_42 = arith.constant 3.200000e+01 : f32
    %116 = vector.broadcast %cst_42 : f32 to vector<16x1xf32>
    %117 = arith.divf %115, %116 : vector<16x1xf32>
    %118 = vector.broadcast %117 : vector<16x1xf32> to vector<16x32xf32>
    %119 = arith.subf %113, %118 : vector<16x32xf32>
    %120 = arith.mulf %119, %119 : vector<16x32xf32>
    %cst_43 = arith.constant dense<0.000000e+00> : vector<16xf32>
    %121 = vector.multi_reduction <add>, %120, %cst_43 [1] : vector<16x32xf32> to vector<16xf32>
    %122 = vector.shape_cast %121 : vector<16xf32> to vector<16x1xf32>
    %cst_44 = arith.constant 3.200000e+01 : f32
    %123 = vector.broadcast %cst_44 : f32 to vector<16x1xf32>
    %124 = arith.divf %122, %123 : vector<16x1xf32>
    %125 = vector.broadcast %117 : vector<16x1xf32> to vector<16x32xf32>
    %126 = arith.subf %113, %125 : vector<16x32xf32>
    %cst_45 = arith.constant 9.99999974E-6 : f32
    %127 = vector.broadcast %cst_45 : f32 to vector<16x1xf32>
    %128 = arith.addf %124, %127 : vector<16x1xf32>
    %129 = math.rsqrt %128 : vector<16x1xf32>
    %130 = vector.broadcast %129 : vector<16x1xf32> to vector<16x32xf32>
    %131 = arith.mulf %126, %130 : vector<16x32xf32>
    %c10 = arith.constant 10 : index
    %c0_46 = arith.constant 0 : index
    %132 = vector.load %arg5[%c10, %c0_46] : memref<12x128xf32, #tpu.memory_space<vmem>>, vector<1x32xf32>
    %133 = vector.broadcast %132 : vector<1x32xf32> to vector<16x32xf32>
    %134 = arith.mulf %131, %133 : vector<16x32xf32>
    %c11 = arith.constant 11 : index
    %c0_47 = arith.constant 0 : index
    %135 = vector.load %arg5[%c11, %c0_47] : memref<12x128xf32, #tpu.memory_space<vmem>>, vector<1x32xf32>
    %136 = vector.broadcast %135 : vector<1x32xf32> to vector<16x32xf32>
    %137 = arith.addf %134, %136 : vector<16x32xf32>
    %138 = arith.negf %137 : vector<16x32xf32>
    %139 = math.exp %138 : vector<16x32xf32>
    %cst_48 = arith.constant 1.000000e+00 : f32
    %140 = vector.broadcast %cst_48 : f32 to vector<16x32xf32>
    %141 = arith.addf %140, %139 : vector<16x32xf32>
    %142 = arith.divf %140, %141 : vector<16x32xf32>
    %143 = arith.mulf %137, %142 : vector<16x32xf32>
    %c0_49 = arith.constant 0 : index
    %c0_50 = arith.constant 0 : index
    %144 = vector.load %arg6[%c0_49, %c0_50] : memref<16x32xf32, #tpu.memory_space<vmem>>, vector<16x32xf32>
    tpu.vector_store %arg6[%c0_49, %c0_50], %143 {strides = array<i32>} : memref<16x32xf32, #tpu.memory_space<vmem>>, vector<16x32xf32>,
    return
  }
}

</mosaic_0001>

<llo_original>
// kernel: embedding_forward.1
$region0: #{embedding_forward.1}
  #allocation0 [shape = 'u32[]', space=smem, size = 0x4, offset = 0x4, fixed_abs, tag = 'smem constant byte address 0x4 - core index']
  #allocation1 [shape = 'u32[144,128]{1,0:T(1,128)}', space=vmem, size = 0x12000, scoped, tag = 'internal scratch']
  %s0 = inlined_call_operand.vmem [shape: bf16[16,180], index: 0, kind: input, shape index: {}]
  %s1 = inlined_call_operand.vmem [shape: bf16[180,116], index: 1, kind: input, shape index: {}]
  %s2 = inlined_call_operand.vmem [shape: bf16[116,72], index: 2, kind: input, shape index: {}]
  %s3 = inlined_call_operand.vmem [shape: bf16[72,48], index: 3, kind: input, shape index: {}]
  %s4 = inlined_call_operand.vmem [shape: bf16[48,32], index: 4, kind: input, shape index: {}]
  %s5 = inlined_call_operand.vmem [shape: f32[12,128], index: 5, kind: input, shape index: {}]
  %s6 = inlined_call_operand.hbm [shape: f32[16,32], index: 6, kind: output, shape index: {}]
  %s7 = sld [smem:[#allocation0]]
  $region34: #{embedding_forward.1} parent=0
    _
  %s9 = ssub.s32 1, %s7
  %s10 = scalar_select 0, %s9, %s7
  $region1: #{embedding_forward.1} parent=0
    #allocation2 [shape = 'u8[8192]{0}', space=vmem, size = 0x2000, scoped, tag = 'output window, operand 0, single buffered']
    #allocation3 [shape = 's32[1]{0}', space=sflag, size = 0x4, scoped, tag = 'scoped memory for embedding_forward.1']
    %11 = vsyncpa [#allocation3], 0
    // Predicated region
    $region2: #{embedding_forward.1} parent=1 // pred_check
      _
    $region3: #{embedding_forward.1} parent=1 // pred_check_branch
      %13 = sbr.rel (0) target = $region5
    $region4: #{embedding_forward.1} parent=1 // pred_region
      _
    $region5: #{embedding_forward.1} parent=1 // pred_fallthru
      _
    // Predicated region
    $region6: #{embedding_forward.1} parent=1 // pred_check
      _
    $region7: #{embedding_forward.1} parent=1 // pred_check_branch
      %15 = sbr.rel (0) target = $region9
    $region8: #{embedding_forward.1} parent=1 // pred_region
      _
    $region9: #{embedding_forward.1} parent=1 // pred_fallthru
      _
    // Predicated region
    $region10: #{embedding_forward.1} parent=1 // pred_check
      _
    $region11: #{embedding_forward.1} parent=1 // pred_check_branch
      %17 = sbr.rel (0) target = $region13
    $region12: #{embedding_forward.1} parent=1 // pred_region
      _
    $region13: #{embedding_forward.1} parent=1 // pred_fallthru
      _
    // Predicated region
    $region14: #{embedding_forward.1} parent=1 // pred_check
      _
    $region15: #{embedding_forward.1} parent=1 // pred_check_branch
      %19 = sbr.rel (0) target = $region17
    $region16: #{embedding_forward.1} parent=1 // pred_region
      _
    $region17: #{embedding_forward.1} parent=1 // pred_fallthru
      _
    // Predicated region
    $region18: #{embedding_forward.1} parent=1 // pred_check
      _
    $region19: #{embedding_forward.1} parent=1 // pred_check_branch
      %21 = sbr.rel (0) target = $region21
    $region20: #{embedding_forward.1} parent=1 // pred_region
      _
    $region21: #{embedding_forward.1} parent=1 // pred_fallthru
      _
    // Predicated region
    $region22: #{embedding_forward.1} parent=1 // pred_check
      _
    $region23: #{embedding_forward.1} parent=1 // pred_check_branch
      %23 = sbr.rel (0) target = $region25
    $region24: #{embedding_forward.1} parent=1 // pred_region
      _
    $region25: #{embedding_forward.1} parent=1 // pred_fallthru
      _
    %v25 = vld [vmem:[%s0] sm:$0xff]
    %v26 = vld [vmem:[%s0 + $0x8] sm:$0xff]
    %v27 = vld [vmem:[%s1] sm:$0xf]
    %v28 = vld [vmem:[%s1 + $0x4] sm:$0xf]
    %v29 = vld [vmem:[%s1 + $0x8] sm:$0xf]
    %v30 = vld [vmem:[%s1 + $0xc] sm:$0xf]
    %v31 = vld [vmem:[%s1 + $0x10] sm:$0xf]
    %v32 = vld [vmem:[%s1 + $0x14] sm:$0xf]
    %v33 = vld [vmem:[%s1 + $0x18] sm:$0xf]
    %v34 = vld [vmem:[%s1 + $0x1c] sm:$0xf]
    %v35 = vld [vmem:[%s1 + $0x20] sm:$0xf]
    %v36 = vld [vmem:[%s1 + $0x24] sm:$0xf]
    %v37 = vld [vmem:[%s1 + $0x28] sm:$0xf]
    %v38 = vld [vmem:[%s1 + $0x2c] sm:$0xf]
    %v39 = vld [vmem:[%s1 + $0x30] sm:$0xf]
    %v40 = vld [vmem:[%s1 + $0x34] sm:$0xf]
    %v41 = vld [vmem:[%s1 + $0x38] sm:$0xf]
    %v42 = vld [vmem:[%s1 + $0x3c] sm:$0xf]
    %v43 = vld [vmem:[%s1 + $0x40] sm:$0xf]
    %v44 = vld [vmem:[%s1 + $0x44] sm:$0xf]
    %v45 = vld [vmem:[%s1 + $0x48] sm:$0xf]
    %v46 = vld [vmem:[%s1 + $0x4c] sm:$0xf]
    %v47 = vld [vmem:[%s1 + $0x50] sm:$0xf]
    %v48 = vld [vmem:[%s1 + $0x54] sm:$0xf]
    %v49 = vld [vmem:[%s1 + $0x58] sm:$0x3]
    %v50 = vld [vmem:[%s5] sm:$0x1]
    %v51 = vlaneseq
    %v52 = vshrl.u32 %v51, 7
    %v53 = vsub.s32 0, %v52
    %v54 = vrot.slane %v50, %v53
    %v57 = vunpack.c.l.b16 %v25
    %v58 = vunpack.c.h.b16 %v25
    %v59 = vunpack.c.l.b16 %v26
    %v60 = vunpack.c.h.b16 %v26
    %v61 = vpack.c.b16 %v59, %v57
    %v62 = vpack.c.b16 %v60, %v58
    %v87 = vunpack.c.l.b16 %v27
    %v88 = vunpack.c.l.b16 %v28
    %v89 = vunpack.c.l.b16 %v29
    %v90 = vunpack.c.l.b16 %v30
    %v91 = vunpack.c.l.b16 %v31
    %v92 = vunpack.c.l.b16 %v32
    %v93 = vunpack.c.l.b16 %v33
    %v94 = vunpack.c.l.b16 %v34
    %v95 = vunpack.c.l.b16 %v35
    %v96 = vunpack.c.l.b16 %v36
    %v97 = vunpack.c.l.b16 %v37
    %v98 = vunpack.c.l.b16 %v38
    %v99 = vunpack.c.l.b16 %v39
    %v100 = vunpack.c.l.b16 %v40
    %v101 = vunpack.c.l.b16 %v41
    %v102 = vunpack.c.l.b16 %v42
    %v103 = vunpack.c.l.b16 %v43
    %v104 = vunpack.c.l.b16 %v44
    %v105 = vunpack.c.l.b16 %v45
    %v106 = vunpack.c.l.b16 %v46
    %v107 = vunpack.c.l.b16 %v47
    %v108 = vunpack.c.l.b16 %v48
    %v109 = vunpack.c.l.b16 %v49
    %v110 = vpack.c.b16 %v88, %v87
    %v111 = vpack.c.b16 %v90, %v89
    %v112 = vpack.c.b16 %v92, %v91
    %v113 = vpack.c.b16 %v94, %v93
    %v114 = vpack.c.b16 %v96, %v95
    %v115 = vpack.c.b16 %v98, %v97
    %v116 = vpack.c.b16 %v100, %v99
    %v117 = vpack.c.b16 %v102, %v101
    %v118 = vpack.c.b16 %v104, %v103
    %v119 = vpack.c.b16 %v106, %v105
    %v120 = vpack.c.b16 %v108, %v107
    %v121 = vpack.c.b16 %v109, %v109
    %vm133 = vcmask 424960
    %v135 = vsel %vm133, %v62, 0
    %vm137 = vcmask 1041408
    %v139 = vsel %vm137, %v121, 0
    %141 = vmatprep.subr.bf16.mxu0 0
    %142 = vmatpush1.bf16.msra.mxu0 %v110
    %143 = vmatprep.subr.bf16.mxu0 0
    %144 = vmatpush1.bf16.msra.mxu0 %v111
    %145 = vmatprep.subr.bf16.mxu0 0
    %146 = vmatpush1.bf16.msra.mxu0 %v112
    %147 = vmatprep.subr.bf16.mxu0 0
    %148 = vmatpush1.bf16.msra.mxu0 %v113
    %149 = vmatprep.subr.bf16.mxu0 0
    %150 = vmatpush1.bf16.msra.mxu0 %v114
    %151 = vmatprep.subr.bf16.mxu0 0
    %152 = vmatpush1.bf16.msra.mxu0 %v115
    %153 = vmatprep.subr.bf16.mxu0 0
    %154 = vmatpush1.bf16.msra.mxu0 %v116
    %155 = vmatprep.subr.bf16.mxu0 0
    %156 = vmatpush1.bf16.msra.mxu0 %v117
    %157 = vmatprep.subr.bf16.mxu0 0
    %158 = vmatpush1.bf16.msra.mxu0 %v118
    %159 = vmatprep.subr.bf16.mxu0 0
    %160 = vmatpush1.bf16.msra.mxu0 %v119
    %161 = vmatprep.subr.bf16.mxu0 0
    %162 = vmatpush1.bf16.msra.mxu0 %v120
    %163 = vmatprep.subr.bf16.mxu0 0
    %164 = vmatpush1.bf16.msra.mxu0 %v139
    %165 = vmatprep.subr.bf16.mxu0 0
    %166 = vmatpush1.bf16.msra.mxu0 0
    %167 = vmatprep.subr.bf16.mxu0 0
    %168 = vmatpush1.bf16.msra.mxu0 0
    %169 = vmatprep.subr.bf16.mxu0 0
    %170 = vmatpush1.bf16.msra.mxu0 0
    %171 = vmatprep.subr.bf16.mxu0 0
    %172 = vmatpush1.bf16.msra.mxu0 0
    %173 = vmatprep.mubr.bf16.mxu0 %v135
    %174 = vmatmul.mubr.bf16.gmra.mrb[0].mxu0 %v61
    %v175 = vpop.f32.mrb[0].mxu0
    %v176 = vadd.f32 %v54, %v175
    %v177 = vpop.f32.mrb[0].mxu0
    %v178 = vpop.f32.mrb[0].mxu0
    %v179 = vadd.f32 %v54, %v178
    %v180 = vpop.f32.mrb[0].mxu0
    %181 = vdwg.mxu0
    %vm182 = vcmask 949248
    %v183 = vsel %vm182, %v176, 0.0
    %184 = vadd.xlane.f32.xlu0 %v183
    %v185 = vpop.xlane.xlu0 %184
    %v186 = vsel %vm182, %v179, 0.0
    %187 = vadd.xlane.f32.xlu0 %v186
    %v188 = vpop.xlane.xlu0 %187
    %v189 = vrcp.pop 116.0
    %v190 = vmul.f32 %v185, %v189
    %v191 = vmul.f32 %v188, %v189
    %v192 = vsub.f32 %v176, %v190
    %v193 = vsub.f32 %v179, %v191
    %v194 = vmul.f32 %v192, %v192
    %v195 = vmul.f32 %v193, %v193
    %v196 = vsel %vm182, %v194, 0.0
    %197 = vadd.xlane.f32.xlu0 %v196
    %v198 = vpop.xlane.xlu0 %197
    %v199 = vsel %vm182, %v195, 0.0
    %200 = vadd.xlane.f32.xlu0 %v199
    %v201 = vpop.xlane.xlu0 %200
    %v202 = vmul.f32 %v198, %v189
    %v203 = vmul.f32 %v201, %v189
    %v204 = vadd.f32 %v202, 1e-05
    %v205 = vadd.f32 %v203, 1e-05
    %v206 = vrsqrt.pop %v204
    %v207 = vrsqrt.pop %v205
    %v208 = vmul.f32 %v192, %v206
    %v209 = vmul.f32 %v193, %v207
    %v210 = vld [vmem:[%s5 + $0x1] sm:$0x1]
    %v211 = vlaneseq
    %v212 = vshrl.u32 %v211, 7
    %v213 = vsub.s32 0, %v212
    %v214 = vrot.slane %v210, %v213
    %v215 = vmul.f32 %v208, %v214
    %v216 = vmul.f32 %v209, %v214
    %v217 = vld [vmem:[%s5 + $0x2] sm:$0x1]
    %v218 = vlaneseq
    %v219 = vshrl.u32 %v218, 7
    %v220 = vsub.s32 0, %v219
    %v221 = vrot.slane %v217, %v220
    %v222 = vadd.f32 %v215, %v221
    %v223 = vadd.f32 %v216, %v221
    %v224 = vxor.u32 %v222, 2147483648
    %v225 = vxor.u32 %v223, 2147483648
    %v226 = vmul.f32 %v224, 1.442695
    %v227 = vpow.pop %v226
    %v228 = vmul.f32 %v225, 1.442695
    %v229 = vpow.pop %v228
    %v230 = vadd.f32 %v227, 1.0
    %v231 = vadd.f32 %v229, 1.0
    %v232 = vrcp.pop %v230
    %v233 = vmul.f32 1.0, %v232
    %v234 = vrcp.pop %v231
    %v235 = vmul.f32 1.0, %v234
    %v236 = vmul.f32 %v222, %v233
    %v237 = vmul.f32 %v223, %v235
    %v238 = vpack.c.bf16 %v237, %v236
    %v239 = vld [vmem:[%s2] sm:$0xf]
    %v240 = vld [vmem:[%s2 + $0x4] sm:$0xf]
    %v241 = vld [vmem:[%s2 + $0x8] sm:$0xf]
    %v242 = vld [vmem:[%s2 + $0xc] sm:$0xf]
    %v243 = vld [vmem:[%s2 + $0x10] sm:$0xf]
    %v244 = vld [vmem:[%s2 + $0x14] sm:$0xf]
    %v245 = vld [vmem:[%s2 + $0x18] sm:$0xf]
    %v246 = vld [vmem:[%s2 + $0x1c] sm:$0xf]
    %v247 = vld [vmem:[%s2 + $0x20] sm:$0xf]
    %v248 = vld [vmem:[%s2 + $0x24] sm:$0xf]
    %v249 = vld [vmem:[%s2 + $0x28] sm:$0xf]
    %v250 = vld [vmem:[%s2 + $0x2c] sm:$0xf]
    %v251 = vld [vmem:[%s2 + $0x30] sm:$0xf]
    %v252 = vld [vmem:[%s2 + $0x34] sm:$0xf]
    %v253 = vld [vmem:[%s2 + $0x38] sm:$0x3]
    %v254 = vld [vmem:[%s5 + $0x3] sm:$0x1]
    %v255 = vlaneseq
    %v256 = vshrl.u32 %v255, 7
    %v257 = vsub.s32 0, %v256
    %v258 = vrot.slane %v254, %v257
    %v274 = vunpack.c.l.b16 %v239
    %v275 = vunpack.c.l.b16 %v240
    %v276 = vunpack.c.l.b16 %v241
    %v277 = vunpack.c.l.b16 %v242
    %v278 = vunpack.c.l.b16 %v243
    %v279 = vunpack.c.l.b16 %v244
    %v280 = vunpack.c.l.b16 %v245
    %v281 = vunpack.c.l.b16 %v246
    %v282 = vunpack.c.l.b16 %v247
    %v283 = vunpack.c.l.b16 %v248
    %v284 = vunpack.c.l.b16 %v249
    %v285 = vunpack.c.l.b16 %v250
    %v286 = vunpack.c.l.b16 %v251
    %v287 = vunpack.c.l.b16 %v252
    %v288 = vunpack.c.l.b16 %v253
    %v289 = vpack.c.b16 %v275, %v274
    %v290 = vpack.c.b16 %v277, %v276
    %v291 = vpack.c.b16 %v279, %v278
    %v292 = vpack.c.b16 %v281, %v280
    %v293 = vpack.c.b16 %v283, %v282
    %v294 = vpack.c.b16 %v285, %v284
    %v295 = vpack.c.b16 %v287, %v286
    %v296 = vpack.c.b16 %v288, %v288
    %v305 = vsel %vm182, %v238, 0
    %v308 = vsel %vm137, %v296, 0
    %310 = vmatprep.subr.bf16.mxu0 0
    %311 = vmatpush1.bf16.msra.mxu0 %v289
    %312 = vmatprep.subr.bf16.mxu0 0
    %313 = vmatpush1.bf16.msra.mxu0 %v290
    %314 = vmatprep.subr.bf16.mxu0 0
    %315 = vmatpush1.bf16.msra.mxu0 %v291
    %316 = vmatprep.subr.bf16.mxu0 0
    %317 = vmatpush1.bf16.msra.mxu0 %v292
    %318 = vmatprep.subr.bf16.mxu0 0
    %319 = vmatpush1.bf16.msra.mxu0 %v293
    %320 = vmatprep.subr.bf16.mxu0 0
    %321 = vmatpush1.bf16.msra.mxu0 %v294
    %322 = vmatprep.subr.bf16.mxu0 0
    %323 = vmatpush1.bf16.msra.mxu0 %v295
    %324 = vmatprep.subr.bf16.mxu0 0
    %325 = vmatpush1.bf16.msra.mxu0 %v308
    %326 = vmatprep.subr.bf16.mxu0 0
    %327 = vmatpush1.bf16.msra.mxu0 0
    %328 = vmatprep.subr.bf16.mxu0 0
    %329 = vmatpush1.bf16.msra.mxu0 0
    %330 = vmatprep.subr.bf16.mxu0 0
    %331 = vmatpush1.bf16.msra.mxu0 0
    %332 = vmatprep.subr.bf16.mxu0 0
    %333 = vmatpush1.bf16.msra.mxu0 0
    %334 = vmatprep.subr.bf16.mxu0 0
    %335 = vmatpush1.bf16.msra.mxu0 0
    %336 = vmatprep.subr.bf16.mxu0 0
    %337 = vmatpush1.bf16.msra.mxu0 0
    %338 = vmatprep.subr.bf16.mxu0 0
    %339 = vmatpush1.bf16.msra.mxu0 0
    %340 = vmatprep.subr.bf16.mxu0 0
    %341 = vmatpush1.bf16.msra.mxu0 0
    %342 = vmatprep.mubr.bf16.mxu0 0
    %343 = vmatmul.mubr.bf16.gmra.mrb[0].mxu0 %v305
    %v344 = vpop.f32.mrb[0].mxu0
    %v345 = vadd.f32 %v258, %v344
    %v346 = vpop.f32.mrb[0].mxu0
    %v347 = vpop.f32.mrb[0].mxu0
    %v348 = vadd.f32 %v258, %v347
    %v349 = vpop.f32.mrb[0].mxu0
    %350 = vdwg.mxu0
    %vm351 = vcmask 588800
    %v352 = vsel %vm351, %v345, 0.0
    %353 = vadd.xlane.f32.xlu0 %v352
    %v354 = vpop.xlane.xlu0 %353
    %v355 = vsel %vm351, %v348, 0.0
    %356 = vadd.xlane.f32.xlu0 %v355
    %v357 = vpop.xlane.xlu0 %356
    %v358 = vrcp.pop 72.0
    %v359 = vmul.f32 %v354, %v358
    %v360 = vmul.f32 %v357, %v358
    %v361 = vsub.f32 %v345, %v359
    %v362 = vsub.f32 %v348, %v360
    %v363 = vmul.f32 %v361, %v361
    %v364 = vmul.f32 %v362, %v362
    %v365 = vsel %vm351, %v363, 0.0
    %366 = vadd.xlane.f32.xlu0 %v365
    %v367 = vpop.xlane.xlu0 %366
    %v368 = vsel %vm351, %v364, 0.0
    %369 = vadd.xlane.f32.xlu0 %v368
    %v370 = vpop.xlane.xlu0 %369
    %v371 = vmul.f32 %v367, %v358
    %v372 = vmul.f32 %v370, %v358
    %v373 = vadd.f32 %v371, 1e-05
    %v374 = vadd.f32 %v372, 1e-05
    %v375 = vrsqrt.pop %v373
    %v376 = vrsqrt.pop %v374
    %v377 = vmul.f32 %v361, %v375
    %v378 = vmul.f32 %v362, %v376
    %v379 = vld [vmem:[%s5 + $0x4] sm:$0x1]
    %v380 = vlaneseq
    %v381 = vshrl.u32 %v380, 7
    %v382 = vsub.s32 0, %v381
    %v383 = vrot.slane %v379, %v382
    %v384 = vmul.f32 %v377, %v383
    %v385 = vmul.f32 %v378, %v383
    %v386 = vld [vmem:[%s5 + $0x5] sm:$0x1]
    %v387 = vlaneseq
    %v388 = vshrl.u32 %v387, 7
    %v389 = vsub.s32 0, %v388
    %v390 = vrot.slane %v386, %v389
    %v391 = vadd.f32 %v384, %v390
    %v392 = vadd.f32 %v385, %v390
    %v393 = vxor.u32 %v391, 2147483648
    %v394 = vxor.u32 %v392, 2147483648
    %v395 = vmul.f32 %v393, 1.442695
    %v396 = vpow.pop %v395
    %v397 = vmul.f32 %v394, 1.442695
    %v398 = vpow.pop %v397
    %v399 = vadd.f32 %v396, 1.0
    %v400 = vadd.f32 %v398, 1.0
    %v401 = vrcp.pop %v399
    %v402 = vmul.f32 1.0, %v401
    %v403 = vrcp.pop %v400
    %v404 = vmul.f32 1.0, %v403
    %v405 = vmul.f32 %v391, %v402
    %v406 = vmul.f32 %v392, %v404
    %v407 = vpack.c.bf16 %v406, %v405
    %v408 = vld [vmem:[%s3] sm:$0xf]
    %v409 = vld [vmem:[%s3 + $0x4] sm:$0xf]
    %v410 = vld [vmem:[%s3 + $0x8] sm:$0xf]
    %v411 = vld [vmem:[%s3 + $0xc] sm:$0xf]
    %v412 = vld [vmem:[%s3 + $0x10] sm:$0xf]
    %v413 = vld [vmem:[%s3 + $0x14] sm:$0xf]
    %v414 = vld [vmem:[%s3 + $0x18] sm:$0xf]
    %v415 = vld [vmem:[%s3 + $0x1c] sm:$0xf]
    %v416 = vld [vmem:[%s3 + $0x20] sm:$0xf]
    %v417 = vld [vmem:[%s5 + $0x6] sm:$0x1]
    %v418 = vlaneseq
    %v419 = vshrl.u32 %v418, 7
    %v420 = vsub.s32 0, %v419
    %v421 = vrot.slane %v417, %v420
    %v431 = vunpack.c.l.b16 %v408
    %v432 = vunpack.c.l.b16 %v409
    %v433 = vunpack.c.l.b16 %v410
    %v434 = vunpack.c.l.b16 %v411
    %v435 = vunpack.c.l.b16 %v412
    %v436 = vunpack.c.l.b16 %v413
    %v437 = vunpack.c.l.b16 %v414
    %v438 = vunpack.c.l.b16 %v415
    %v439 = vunpack.c.l.b16 %v416
    %v440 = vpack.c.b16 %v432, %v431
    %v441 = vpack.c.b16 %v434, %v433
    %v442 = vpack.c.b16 %v436, %v435
    %v443 = vpack.c.b16 %v438, %v437
    %v444 = vpack.c.b16 %v439, %v439
    %v450 = vsel %vm351, %v407, 0
    %vm452 = vcmask 1043456
    %v454 = vsel %vm452, %v444, 0
    %456 = vmatprep.subr.bf16.mxu0 0
    %457 = vmatpush1.bf16.msra.mxu0 %v440
    %458 = vmatprep.subr.bf16.mxu0 0
    %459 = vmatpush1.bf16.msra.mxu0 %v441
    %460 = vmatprep.subr.bf16.mxu0 0
    %461 = vmatpush1.bf16.msra.mxu0 %v442
    %462 = vmatprep.subr.bf16.mxu0 0
    %463 = vmatpush1.bf16.msra.mxu0 %v443
    %464 = vmatprep.subr.bf16.mxu0 0
    %465 = vmatpush1.bf16.msra.mxu0 %v454
    %466 = vmatprep.subr.bf16.mxu0 0
    %467 = vmatpush1.bf16.msra.mxu0 0
    %468 = vmatprep.subr.bf16.mxu0 0
    %469 = vmatpush1.bf16.msra.mxu0 0
    %470 = vmatprep.subr.bf16.mxu0 0
    %471 = vmatpush1.bf16.msra.mxu0 0
    %472 = vmatprep.subr.bf16.mxu0 0
    %473 = vmatpush1.bf16.msra.mxu0 0
    %474 = vmatprep.subr.bf16.mxu0 0
    %475 = vmatpush1.bf16.msra.mxu0 0
    %476 = vmatprep.subr.bf16.mxu0 0
    %477 = vmatpush1.bf16.msra.mxu0 0
    %478 = vmatprep.subr.bf16.mxu0 0
    %479 = vmatpush1.bf16.msra.mxu0 0
    %480 = vmatprep.subr.bf16.mxu0 0
    %481 = vmatpush1.bf16.msra.mxu0 0
    %482 = vmatprep.subr.bf16.mxu0 0
    %483 = vmatpush1.bf16.msra.mxu0 0
    %484 = vmatprep.subr.bf16.mxu0 0
    %485 = vmatpush1.bf16.msra.mxu0 0
    %486 = vmatprep.subr.bf16.mxu0 0
    %487 = vmatpush1.bf16.msra.mxu0 0
    %488 = vmatprep.mubr.bf16.mxu0 0
    %489 = vmatmul.mubr.bf16.gmra.mrb[0].mxu0 %v450
    %v490 = vpop.f32.mrb[0].mxu0
    %v491 = vadd.f32 %v421, %v490
    %v492 = vpop.f32.mrb[0].mxu0
    %v493 = vpop.f32.mrb[0].mxu0
    %v494 = vadd.f32 %v421, %v493
    %v495 = vpop.f32.mrb[0].mxu0
    %496 = vdwg.mxu0
    %vm497 = vcmask 392192
    %v498 = vsel %vm497, %v491, 0.0
    %499 = vadd.xlane.f32.xlu0 %v498
    %v500 = vpop.xlane.xlu0 %499
    %v501 = vsel %vm497, %v494, 0.0
    %502 = vadd.xlane.f32.xlu0 %v501
    %v503 = vpop.xlane.xlu0 %502
    %v504 = vrcp.pop 48.0
    %v505 = vmul.f32 %v500, %v504
    %v506 = vmul.f32 %v503, %v504
    %v507 = vsub.f32 %v491, %v505
    %v508 = vsub.f32 %v494, %v506
    %v509 = vmul.f32 %v507, %v507
    %v510 = vmul.f32 %v508, %v508
    %v511 = vsel %vm497, %v509, 0.0
    %512 = vadd.xlane.f32.xlu0 %v511
    %v513 = vpop.xlane.xlu0 %512
    %v514 = vsel %vm497, %v510, 0.0
    %515 = vadd.xlane.f32.xlu0 %v514
    %v516 = vpop.xlane.xlu0 %515
    %v517 = vmul.f32 %v513, %v504
    %v518 = vmul.f32 %v516, %v504
    %v519 = vadd.f32 %v517, 1e-05
    %v520 = vadd.f32 %v518, 1e-05
    %v521 = vrsqrt.pop %v519
    %v522 = vrsqrt.pop %v520
    %v523 = vmul.f32 %v507, %v521
    %v524 = vmul.f32 %v508, %v522
    %v525 = vld [vmem:[%s5 + $0x7] sm:$0x1]
    %v526 = vlaneseq
    %v527 = vshrl.u32 %v526, 7
    %v528 = vsub.s32 0, %v527
    %v529 = vrot.slane %v525, %v528
    %v530 = vmul.f32 %v523, %v529
    %v531 = vmul.f32 %v524, %v529
    %v532 = vld [vmem:[%s5 + $0x8] sm:$0x1]
    %v533 = vlaneseq
    %v534 = vshrl.u32 %v533, 7
    %v535 = vsub.s32 0, %v534
    %v536 = vrot.slane %v532, %v535
    %v537 = vadd.f32 %v530, %v536
    %v538 = vadd.f32 %v531, %v536
    %v539 = vxor.u32 %v537, 2147483648
    %v540 = vxor.u32 %v538, 2147483648
    %v541 = vmul.f32 %v539, 1.442695
    %v542 = vpow.pop %v541
    %v543 = vmul.f32 %v540, 1.442695
    %v544 = vpow.pop %v543
    %v545 = vadd.f32 %v542, 1.0
    %v546 = vadd.f32 %v544, 1.0
    %v547 = vrcp.pop %v545
    %v548 = vmul.f32 1.0, %v547
    %v549 = vrcp.pop %v546
    %v550 = vmul.f32 1.0, %v549
    %v551 = vmul.f32 %v537, %v548
    %v552 = vmul.f32 %v538, %v550
    %v553 = vpack.c.bf16 %v552, %v551
    %v554 = vld [vmem:[%s4] sm:$0xf]
    %v555 = vld [vmem:[%s4 + $0x4] sm:$0xf]
    %v556 = vld [vmem:[%s4 + $0x8] sm:$0xf]
    %v557 = vld [vmem:[%s4 + $0xc] sm:$0xf]
    %v558 = vld [vmem:[%s4 + $0x10] sm:$0xf]
    %v559 = vld [vmem:[%s4 + $0x14] sm:$0xf]
    %v560 = vld [vmem:[%s5 + $0x9] sm:$0x1]
    %v561 = vlaneseq
    %v562 = vshrl.u32 %v561, 7
    %v563 = vsub.s32 0, %v562
    %v564 = vrot.slane %v560, %v563
    %v571 = vunpack.c.l.b16 %v554
    %v572 = vunpack.c.l.b16 %v555
    %v573 = vunpack.c.l.b16 %v556
    %v574 = vunpack.c.l.b16 %v557
    %v575 = vunpack.c.l.b16 %v558
    %v576 = vunpack.c.l.b16 %v559
    %v577 = vpack.c.b16 %v572, %v571
    %v578 = vpack.c.b16 %v574, %v573
    %v579 = vpack.c.b16 %v576, %v575
    %v584 = vsel %vm497, %v553, 0
    %586 = vmatprep.subr.bf16.mxu0 0
    %587 = vmatpush1.bf16.msra.mxu0 %v577
    %588 = vmatprep.subr.bf16.mxu0 0
    %589 = vmatpush1.bf16.msra.mxu0 %v578
    %590 = vmatprep.subr.bf16.mxu0 0
    %591 = vmatpush1.bf16.msra.mxu0 %v579
    %592 = vmatprep.subr.bf16.mxu0 0
    %593 = vmatpush1.bf16.msra.mxu0 0
    %594 = vmatprep.subr.bf16.mxu0 0
    %595 = vmatpush1.bf16.msra.mxu0 0
    %596 = vmatprep.subr.bf16.mxu0 0
    %597 = vmatpush1.bf16.msra.mxu0 0
    %598 = vmatprep.subr.bf16.mxu0 0
    %599 = vmatpush1.bf16.msra.mxu0 0
    %600 = vmatprep.subr.bf16.mxu0 0
    %601 = vmatpush1.bf16.msra.mxu0 0
    %602 = vmatprep.subr.bf16.mxu0 0
    %603 = vmatpush1.bf16.msra.mxu0 0
    %604 = vmatprep.subr.bf16.mxu0 0
    %605 = vmatpush1.bf16.msra.mxu0 0
    %606 = vmatprep.subr.bf16.mxu0 0
    %607 = vmatpush1.bf16.msra.mxu0 0
    %608 = vmatprep.subr.bf16.mxu0 0
    %609 = vmatpush1.bf16.msra.mxu0 0
    %610 = vmatprep.subr.bf16.mxu0 0
    %611 = vmatpush1.bf16.msra.mxu0 0
    %612 = vmatprep.subr.bf16.mxu0 0
    %613 = vmatpush1.bf16.msra.mxu0 0
    %614 = vmatprep.subr.bf16.mxu0 0
    %615 = vmatpush1.bf16.msra.mxu0 0
    %616 = vmatprep.subr.bf16.mxu0 0
    %617 = vmatpush1.bf16.msra.mxu0 0
    %618 = vmatprep.mubr.bf16.mxu0 0
    %619 = vmatmul.mubr.bf16.gmra.mrb[0].mxu0 %v584
    %v620 = vpop.f32.mrb[0].mxu0
    %v621 = vadd.f32 %v564, %v620
    %v622 = vpop.f32.mrb[0].mxu0
    %v623 = vpop.f32.mrb[0].mxu0
    %v624 = vadd.f32 %v564, %v623
    %v625 = vpop.f32.mrb[0].mxu0
    %626 = vdwg.mxu0
    %vm627 = vcmask 261120
    %v628 = vsel %vm627, %v621, 0.0
    %629 = vadd.xlane.f32.xlu0 %v628
    %v630 = vpop.xlane.xlu0 %629
    %v631 = vsel %vm627, %v624, 0.0
    %632 = vadd.xlane.f32.xlu0 %v631
    %v633 = vpop.xlane.xlu0 %632
    %v634 = vrcp.pop 32.0
    %v635 = vmul.f32 %v630, %v634
    %v636 = vmul.f32 %v633, %v634
    %v637 = vsub.f32 %v621, %v635
    %v638 = vsub.f32 %v624, %v636
    %v639 = vmul.f32 %v637, %v637
    %v640 = vmul.f32 %v638, %v638
    %v641 = vsel %vm627, %v639, 0.0
    %642 = vadd.xlane.f32.xlu0 %v641
    %v643 = vpop.xlane.xlu0 %642
    %v644 = vsel %vm627, %v640, 0.0
    %645 = vadd.xlane.f32.xlu0 %v644
    %v646 = vpop.xlane.xlu0 %645
    %v647 = vmul.f32 %v643, %v634
    %v648 = vmul.f32 %v646, %v634
    %v649 = vadd.f32 %v647, 1e-05
    %v650 = vadd.f32 %v648, 1e-05
    %v651 = vrsqrt.pop %v649
    %v652 = vrsqrt.pop %v650
    %v653 = vmul.f32 %v637, %v651
    %v654 = vmul.f32 %v638, %v652
    %v655 = vld [vmem:[%s5 + $0xa] sm:$0x1]
    %v656 = vlaneseq
    %v657 = vshrl.u32 %v656, 7
    %v658 = vsub.s32 0, %v657
    %v659 = vrot.slane %v655, %v658
    %v660 = vmul.f32 %v653, %v659
    %v661 = vmul.f32 %v654, %v659
    %v662 = vld [vmem:[%s5 + $0xb] sm:$0x1]
    %v663 = vlaneseq
    %v664 = vshrl.u32 %v663, 7
    %v665 = vsub.s32 0, %v664
    %v666 = vrot.slane %v662, %v665
    %v667 = vadd.f32 %v660, %v666
    %v668 = vadd.f32 %v661, %v666
    %v669 = vxor.u32 %v667, 2147483648
    %v670 = vxor.u32 %v668, 2147483648
    %v671 = vmul.f32 %v669, 1.442695
    %v672 = vpow.pop %v671
    %v673 = vmul.f32 %v670, 1.442695
    %v674 = vpow.pop %v673
    %v675 = vadd.f32 %v672, 1.0
    %v676 = vadd.f32 %v674, 1.0
    %v677 = vrcp.pop %v675
    %v678 = vmul.f32 1.0, %v677
    %v679 = vrcp.pop %v676
    %v680 = vmul.f32 1.0, %v679
    %v681 = vmul.f32 %v667, %v678
    %v682 = vmul.f32 %v668, %v680
    %683 = vst.msk [vmem:[#allocation2] sm:$0xff] %vm627, %v681
    %684 = vst.msk [vmem:[#allocation2 + $0x8] sm:$0xff] %vm627, %v682
    // Predicated region
    $region26: #{embedding_forward.1} parent=1 // pred_check
      _
    $region27: #{embedding_forward.1} parent=1 // pred_check_branch
      %686 = sbr.rel (0) target = $region29
    $region28: #{embedding_forward.1} parent=1 // pred_region
      %s688 = ssub.s32 256, 256
      %689 = vsyncadd [#allocation3], %s688
      %s690 = sshll.u32 [#allocation2], 4
      %s691 = int_to_ptr.vmem [resolvable:$true] %s690
      %696 = dma.vmem_to_hbm [thread:$0]  %s691, 256, %s6, [#allocation3], 128, 128, 8
    $region29: #{embedding_forward.1} parent=1 // pred_fallthru
      _
    // Predicated region
    $region30: #{embedding_forward.1} parent=1 // pred_check
      _
    $region31: #{embedding_forward.1} parent=1 // pred_check_branch
      %698 = sbr.rel (0) target = $region33
    $region32: #{embedding_forward.1} parent=1 // pred_region
      %699 = dma.done [#allocation3], 256
    $region33: #{embedding_forward.1} parent=1 // pred_fallthru
      _
    %700 = vsyncpa [#allocation3], 1

</llo_original>
